<compile_context>
chip_gen: v6e
topology: v6e:2x2x1
jax: 0.10.0
libtpu: 0.0.40
codegen_flags: <defaults>
</compile_context>

<pallas_src>
import math

import jax
import jax.numpy as jnp
from jax.experimental import pallas as pl
from jax.experimental.pallas import tpu as pltpu

_SQRT2_INV = 1.0 / math.sqrt(2.0)


def _round_up(x: int, m: int) -> int:
    return ((x + m - 1) // m) * m


def _tpu_generation() -> str:
    try:
        kind = jax.devices()[0].device_kind.lower()
    except Exception:
        return "unknown"
    if "v7" in kind:
        return "v7x"
    if "v6" in kind:
        return "v6e"
    if "v5" in kind:
        return "v5e"
    return "unknown"


# (default token tile, VMEM budget used for tile sizing)
_GEN_CFG = {
    "v5e": (512, 100 << 20),    # 128 MiB physical
    "v6e": (1024, 100 << 20),   # 128 MiB physical; highest compute:HBM ratio
    "v7x": (512, 48 << 20),     # 64 MiB physical per TC
    "unknown": (512, 48 << 20),
}


def _vmem_estimate(tm, tf, d_model_p, x_it, o_it, w_it, use_scratch, w_buf):
    return (2 * tm * d_model_p * x_it            # x tile (double-buffered)
            + 2 * tm * d_model_p * o_it          # out tile
            + w_buf * d_model_p * tf * w_it      # w1 slabs
            + w_buf * tf * d_model_p * w_it      # w2 slabs
            + 2 * tf * w_it                      # b1 slab
            + 2 * d_model_p * w_it               # b2
            + (tm * d_model_p * 4 if use_scratch else 0))


def _ffn_kernel(x_ref, w1_ref, b1_ref, w2_ref, b2_ref, o_ref, *scratch):
    # x_ref:   (tm, d_model_p)   token tile, resident across the d_ff axis
    # w1_ref:  (d_model_p, tf)   linear1 weight slab
    # b1_ref:  (1, tf)           linear1 bias slab
    # w2_ref:  (tf, d_model_p)   linear2 weight slab
    # b2_ref:  (1, d_model_p)    linear2 bias (applied once, at the last slab)
    # o_ref:   (tm, d_model_p)   output tile; doubles as f32 accumulator when no scratch
    acc_ref = scratch[0] if scratch else o_ref
    j = pl.program_id(1)

    @pl.when(j == 0)
    def _():
        acc_ref[...] = jnp.zeros_like(acc_ref)

    # Feed the MXU in the weight dtype (bf16 weights -> bf16 matmul, f32 accumulate).
    x = x_ref[...].astype(w1_ref.dtype)
    h = jnp.dot(x, w1_ref[...], preferred_element_type=jnp.float32)
    h = h + b1_ref[...].astype(jnp.float32)
    # Exact (erf-based) GELU in f32, matching PyTorch F.gelu default.
    h = 0.5 * h * (1.0 + jax.lax.erf(h * _SQRT2_INV))
    # dropout == identity (eval mode).
    acc_ref[...] += jnp.dot(h.astype(w2_ref.dtype), w2_ref[...],
                            preferred_element_type=jnp.float32)

    @pl.when(j == pl.num_programs(1) - 1)
    def _():
        o_ref[...] = (acc_ref[...] + b2_ref[...].astype(jnp.float32)).astype(o_ref.dtype)


def feed_forward(x, w1, b1, w2, b2, *, tm=None, tf=None):
    """x: (B, S, d_model); w1: (d_model, d_ff); w2: (d_ff, d_model)."""
    B, S, d_model = x.shape
    d_ff = w1.shape[1]
    M = B * S

    gen = _tpu_generation()
    tm_default, vmem_budget = _GEN_CFG[gen]

    x_it = jnp.dtype(x.dtype).itemsize
    w_it = jnp.dtype(w1.dtype).itemsize
    o_it = x_it

    # f32 output: accumulate directly into the resident output block (saves VMEM).
    use_scratch = jnp.dtype(x.dtype) != jnp.dtype(jnp.float32)

    d_model_p = _round_up(d_model, 128)

    # d_ff slab: prefer a 256-aligned size that divides d_ff (no padded columns).
    if tf is None:
        for cand in (1024, 512, 256, 128):
            if d_ff % cand == 0:
                tf = cand
                break
        else:
            tf = min(512, _round_up(d_ff, 128))
    d_ff_p = _round_up(d_ff, tf)

    # Token tile: as big as the per-generation VMEM budget allows, so the weight
    # slab DMA is hidden behind tm rows of MXU work.
    if tm is None:
        tm = tm_default
    tm = min(tm, _round_up(M, 8))
    while (_vmem_estimate(tm, tf, d_model_p, x_it, o_it, w_it, use_scratch, 2)
           > vmem_budget and (tm > 64 or tf > 128)):
        if tm > 64:
            tm = max(64, _round_up(tm // 2, 8))
        else:
            tf = max(128, tf // 2)
            d_ff_p = _round_up(d_ff, tf)
    M_p = _round_up(M, tm)

    # v7x has 2 TensorCores sharing the "parallel" token axis: avoid a single tile.
    if gen == "v7x" and M_p // tm < 2 and M_p >= 16:
        tm = _round_up((M_p + 1) // 2, 8)
        M_p = _round_up(M, tm)

    n_tok_tiles = M_p // tm
    n_ff_slabs = d_ff_p // tf

    # Decode-sized M with many slabs is weight-bandwidth bound: deepen buffering.
    w_buf = 2
    if n_tok_tiles <= 2 and n_ff_slabs >= 3:
        if (_vmem_estimate(tm, tf, d_model_p, x_it, o_it, w_it, use_scratch, 3)
                <= vmem_budget):
            w_buf = 3

    # Pad only when needed (aligned shapes skip the extra HBM round-trips).
    # For repeated calls with the same weights, callers can pre-pad w1/b1/w2/b2 once.
    x2d = x.reshape(M, d_model)
    if M_p != M or d_model_p != d_model:
        x2d = jnp.pad(x2d, ((0, M_p - M), (0, d_model_p - d_model)))
    w1_p = w1 if (d_model_p == d_model and d_ff_p == d_ff) else jnp.pad(
        w1, ((0, d_model_p - d_model), (0, d_ff_p - d_ff)))
    b1_p = (b1 if d_ff_p == d_ff else jnp.pad(b1, (0, d_ff_p - d_ff))).reshape(1, d_ff_p)
    w2_p = w2 if (d_model_p == d_model and d_ff_p == d_ff) else jnp.pad(
        w2, ((0, d_ff_p - d_ff), (0, d_model_p - d_model)))
    b2_p = (b2 if d_model_p == d_model
            else jnp.pad(b2, (0, d_model_p - d_model))).reshape(1, d_model_p)

    vmem_bytes = _vmem_estimate(tm, tf, d_model_p, x_it, o_it, w_it, use_scratch, w_buf)
    vmem_limit = min(vmem_budget, int(vmem_bytes * 2) + (4 << 20))

    w_bytes = (w1_p.size + b1_p.size + w2_p.size + b2_p.size) * w_it
    cost = pl.CostEstimate(
        flops=4 * M_p * d_model_p * d_ff_p,                    # two matmuls
        transcendentals=M_p * d_ff_p,                          # erf
        bytes_accessed=((x2d.size + M_p * d_model_p) * x_it    # act read + out write
                        + n_tok_tiles * w_bytes),              # weights re-streamed/tile
    )

    def _wspec(shape, index_map):
        if w_buf > 2:
            return pl.BlockSpec(shape, index_map, pipeline_mode=pl.Buffered(w_buf))
        return pl.BlockSpec(shape, index_map)

    in_specs = [
        pl.BlockSpec((tm, d_model_p), lambda i, j: (i, 0)),   # x tile (held across d_ff)
        _wspec((d_model_p, tf), lambda i, j: (0, j)),         # w1 slab
        pl.BlockSpec((1, tf), lambda i, j: (0, j)),           # b1 slab
        _wspec((tf, d_model_p), lambda i, j: (j, 0)),         # w2 slab
        pl.BlockSpec((1, d_model_p), lambda i, j: (0, 0)),    # b2
    ]
    scratch_shapes = ([pltpu.VMEM((tm, d_model_p), jnp.float32)]
                      if use_scratch else [])

    out = pl.pallas_call(
        _ffn_kernel,
        out_shape=jax.ShapeDtypeStruct((M_p, d_model_p), x.dtype),
        grid_spec=pltpu.PrefetchScalarGridSpec(
            num_scalar_prefetch=0,
            grid=(n_tok_tiles, n_ff_slabs),
            in_specs=in_specs,
            out_specs=pl.BlockSpec((tm, d_model_p), lambda i, j: (i, 0)),
            scratch_shapes=scratch_shapes,
        ),
        compiler_params=pltpu.CompilerParams(
            dimension_semantics=("parallel", "arbitrary"),
            vmem_limit_bytes=vmem_limit,
        ),
        cost_estimate=cost,
    )(x2d, w1_p, b1_p, w2_p, b2_p)

    if M_p != M or d_model_p != d_model:
        out = out[:M, :d_model]
    return out.reshape(B, S, d_model)


def _ref_forward(x, w1, b1, w2, b2):
    h = jnp.dot(x, w1) + b1
    h = 0.5 * h * (1.0 + jax.lax.erf(h / jnp.sqrt(2.0)))
    return jnp.dot(h, w2) + b2


if __name__ == "__main__":
    # Small shapes consistent with the module: batch=2, seq=8, d_model=32, d_ff=64
    B, S, d_model, d_ff = 2, 8, 32, 64

    key = jax.random.PRNGKey(0)
    kx, kw1, kb1, kw2, kb2 = jax.random.split(key, 5)

    x = jax.random.normal(kx, (B, S, d_model), dtype=jnp.float32)

    # nn.Linear(d_model, d_ff): weight (d_ff, d_model); we pass transposed (d_model, d_ff).
    bound1 = 1.0 / math.sqrt(d_model)
    w1 = jax.random.uniform(kw1, (d_model, d_ff), minval=-bound1, maxval=bound1,
                            dtype=jnp.float32)
    b1 = jax.random.uniform(kb1, (d_ff,), minval=-bound1, maxval=bound1,
                            dtype=jnp.float32)

    # nn.Linear(d_ff, d_model): weight (d_model, d_ff); we pass transposed (d_ff, d_model).
    bound2 = 1.0 / math.sqrt(d_ff)
    w2 = jax.random.uniform(kw2, (d_ff, d_model), minval=-bound2, maxval=bound2,
                            dtype=jnp.float32)
    b2 = jax.random.uniform(kb2, (d_model,), minval=-bound2, maxval=bound2,
                            dtype=jnp.float32)

    y = feed_forward(x, w1, b1, w2, b2)
    y = jax.block_until_ready(y)

    y_ref = _ref_forward(x, w1, b1, w2, b2)
    assert y.shape == (B, S, d_model)
    assert jnp.allclose(y, y_ref, atol=1e-5, rtol=1e-5), "mismatch vs pure-JAX reference"

    print("KERNEL_OK")
</pallas_src>

<mosaic_0001>
module attributes {stable_mosaic.version = 11 : i64} {
  func.func @_ffn_kernel(%arg0: i32, %arg1: i32, %arg2: memref<16x128xf32, #tpu.memory_space<vmem>>, %arg3: memref<128x128xf32, #tpu.memory_space<vmem>>, %arg4: memref<1x128xf32, #tpu.memory_space<vmem>>, %arg5: memref<128x128xf32, #tpu.memory_space<vmem>>, %arg6: memref<1x128xf32, #tpu.memory_space<vmem>>, %arg7: memref<16x128xf32, #tpu.memory_space<vmem>>) attributes {dimension_semantics = [#tpu.dimension_semantics<parallel>, #tpu.dimension_semantics<arbitrary>], iteration_bounds = array<i64: 1, 1>, scalar_prefetch = 0 : i64, scratch_operands = 0 : i64, tpu.core_type = #tpu.core_type<tc>, window_params = [{transform_indices = @transform_0, window_bounds = array<i64: 16, 128>}, {transform_indices = @transform_1, window_bounds = array<i64: 128, 128>}, {transform_indices = @transform_2, window_bounds = array<i64: 1, 128>}, {transform_indices = @transform_3, window_bounds = array<i64: 128, 128>}, {pipeline_mode = #tpu.pipeline_mode<synchronous>, transform_indices = @transform_4, window_bounds = array<i64: 1, 128>}, {transform_indices = @transform_5, window_bounds = array<i64: 16, 128>}]} {
    %c0_i32 = arith.constant 0 : i32
    %0 = arith.cmpi eq, %arg1, %c0_i32 : i32
    %1 = arith.extui %0 : i1 to i32
    %c0_i32_0 = arith.constant 0 : i32
    %2 = arith.cmpi ne, %1, %c0_i32_0 : i32
    scf.if %2 {
      %cst_18 = arith.constant 0.000000e+00 : f32
      %25 = vector.broadcast %cst_18 : f32 to vector<16x128xf32>
      %c0_19 = arith.constant 0 : index
      %c0_20 = arith.constant 0 : index
      %26 = vector.load %arg7[%c0_19, %c0_20] : memref<16x128xf32, #tpu.memory_space<vmem>>, vector<16x128xf32>
      tpu.vector_store %arg7[%c0_19, %c0_20], %25 {strides = array<i32>} : memref<16x128xf32, #tpu.memory_space<vmem>>, vector<16x128xf32>,
    } else {
    }
    %c0 = arith.constant 0 : index
    %c0_1 = arith.constant 0 : index
    %3 = vector.load %arg2[%c0, %c0_1] : memref<16x128xf32, #tpu.memory_space<vmem>>, vector<16x128xf32>
    %c0_2 = arith.constant 0 : index
    %c0_3 = arith.constant 0 : index
    %4 = vector.load %arg3[%c0_2, %c0_3] : memref<128x128xf32, #tpu.memory_space<vmem>>, vector<128x128xf32>
    %cst = arith.constant dense<0.000000e+00> : vector<16x128xf32>
    %5 = tpu.matmul %3, %4, %cst {dimension_numbers = #tpu.dot_dimension_numbers<[1], [0], [0], [1], [0, 0, 1, 1], [], []>} : vector<16x128xf32>, vector<128x128xf32>, vector<16x128xf32> -> vector<16x128xf32>
    %c0_4 = arith.constant 0 : index
    %c0_5 = arith.constant 0 : index
    %6 = vector.load %arg4[%c0_4, %c0_5] : memref<1x128xf32, #tpu.memory_space<vmem>>, vector<1x128xf32>
    %7 = vector.broadcast %6 : vector<1x128xf32> to vector<16x128xf32>
    %8 = arith.addf %5, %7 : vector<16x128xf32>
    %cst_6 = arith.constant 5.000000e-01 : f32
    %9 = vector.broadcast %cst_6 : f32 to vector<16x128xf32>
    %10 = arith.mulf %9, %8 : vector<16x128xf32>
    %cst_7 = arith.constant 0.707106769 : f32
    %11 = vector.broadcast %cst_7 : f32 to vector<16x128xf32>
    %12 = arith.mulf %8, %11 : vector<16x128xf32>
    %13 = math.erf %12 : vector<16x128xf32>
    %cst_8 = arith.constant 1.000000e+00 : f32
    %14 = vector.broadcast %cst_8 : f32 to vector<16x128xf32>
    %15 = arith.addf %14, %13 : vector<16x128xf32>
    %16 = arith.mulf %10, %15 : vector<16x128xf32>
    %c0_9 = arith.constant 0 : index
    %c0_10 = arith.constant 0 : index
    %17 = vector.load %arg7[%c0_9, %c0_10] : memref<16x128xf32, #tpu.memory_space<vmem>>, vector<16x128xf32>
    %c0_11 = arith.constant 0 : index
    %c0_12 = arith.constant 0 : index
    %18 = vector.load %arg5[%c0_11, %c0_12] : memref<128x128xf32, #tpu.memory_space<vmem>>, vector<128x128xf32>
    %cst_13 = arith.constant dense<0.000000e+00> : vector<16x128xf32>
    %19 = tpu.matmul %16, %18, %cst_13 {dimension_numbers = #tpu.dot_dimension_numbers<[1], [0], [0], [1], [0, 0, 1, 1], [], []>} : vector<16x128xf32>, vector<128x128xf32>, vector<16x128xf32> -> vector<16x128xf32>
    %20 = arith.addf %17, %19 : vector<16x128xf32>
    %c0_14 = arith.constant 0 : index
    %c0_15 = arith.constant 0 : index
    %21 = vector.load %arg7[%c0_14, %c0_15] : memref<16x128xf32, #tpu.memory_space<vmem>>, vector<16x128xf32>
    tpu.vector_store %arg7[%c0_14, %c0_15], %20 {strides = array<i32>} : memref<16x128xf32, #tpu.memory_space<vmem>>, vector<16x128xf32>,
    %c0_i32_16 = arith.constant 0 : i32
    %22 = arith.cmpi eq, %arg1, %c0_i32_16 : i32
    %23 = arith.extui %22 : i1 to i32
    %c0_i32_17 = arith.constant 0 : i32
    %24 = arith.cmpi ne, %23, %c0_i32_17 : i32
    scf.if %24 {
      %c0_18 = arith.constant 0 : index
      %c0_19 = arith.constant 0 : index
      %25 = vector.load %arg7[%c0_18, %c0_19] : memref<16x128xf32, #tpu.memory_space<vmem>>, vector<16x128xf32>
      %c0_20 = arith.constant 0 : index
      %c0_21 = arith.constant 0 : index
      %26 = vector.load %arg6[%c0_20, %c0_21] : memref<1x128xf32, #tpu.memory_space<vmem>>, vector<1x128xf32>
      %27 = vector.broadcast %26 : vector<1x128xf32> to vector<16x128xf32>
      %28 = arith.addf %25, %27 : vector<16x128xf32>
      %c0_22 = arith.constant 0 : index
      %c0_23 = arith.constant 0 : index
      %29 = vector.load %arg7[%c0_22, %c0_23] : memref<16x128xf32, #tpu.memory_space<vmem>>, vector<16x128xf32>
      tpu.vector_store %arg7[%c0_22, %c0_23], %28 {strides = array<i32>} : memref<16x128xf32, #tpu.memory_space<vmem>>, vector<16x128xf32>,
    } else {
    }
    return
  }
  func.func @transform_0(%arg0: i32, %arg1: i32) -> (i32, i32) {
    %c0_i32 = arith.constant 0 : i32
    %c0_i32_0 = arith.constant 0 : i32
    return %arg0, %c0_i32 : i32, i32
  }
  func.func @transform_1(%arg0: i32, %arg1: i32) -> (i32, i32) {
    %c0_i32 = arith.constant 0 : i32
    %c0_i32_0 = arith.constant 0 : i32
    return %c0_i32, %arg1 : i32, i32
  }
  func.func @transform_2(%arg0: i32, %arg1: i32) -> (i32, i32) {
    %c0_i32 = arith.constant 0 : i32
    %c0_i32_0 = arith.constant 0 : i32
    return %c0_i32, %arg1 : i32, i32
  }
  func.func @transform_3(%arg0: i32, %arg1: i32) -> (i32, i32) {
    %c0_i32 = arith.constant 0 : i32
    %c0_i32_0 = arith.constant 0 : i32
    return %arg1, %c0_i32 : i32, i32
  }
  func.func @transform_4(%arg0: i32, %arg1: i32) -> (i32, i32) {
    %c0_i32 = arith.constant 0 : i32
    %c0_i32_0 = arith.constant 0 : i32
    %c0_i32_1 = arith.constant 0 : i32
    return %c0_i32, %c0_i32_0 : i32, i32
  }
  func.func @transform_5(%arg0: i32, %arg1: i32) -> (i32, i32) {
    %c0_i32 = arith.constant 0 : i32
    %c0_i32_0 = arith.constant 0 : i32
    return %arg0, %c0_i32 : i32, i32
  }
}

</mosaic_0001>

<llo_original>
// kernel: tpu_custom_call.1
$region0: #{tpu_custom_call.1}
  #allocation0 [shape = 'u32[]', space=smem, size = 0x4, offset = 0x4, fixed_abs, tag = 'smem constant byte address 0x4 - core index']
  #allocation1 [shape = 'u32[144,128]{1,0:T(1,128)}', space=vmem, size = 0x12000, scoped, tag = 'internal scratch']
  %s0 = inlined_call_operand.hbm [shape: f32[16,128], index: 0, kind: input, shape index: {}]
  %s1 = inlined_call_operand.hbm [shape: f32[128,128], index: 1, kind: input, shape index: {}]
  %s2 = inlined_call_operand.vmem [shape: f32[1,128], index: 2, kind: input, shape index: {}]
  %s3 = inlined_call_operand.hbm [shape: f32[128,128], index: 3, kind: input, shape index: {}]
  %s4 = inlined_call_operand.vmem [shape: f32[1,128], index: 4, kind: input, shape index: {}]
  %s5 = inlined_call_operand.hbm [shape: f32[16,128], index: 5, kind: output, shape index: {}]
  %s6 = sld [smem:[#allocation0]]
  $region50: #{tpu_custom_call.1} parent=0
    _
  %s8 = ssub.s32 1, %s6
  %s9 = scalar_select 0, %s8, %s6
  $region1: #{tpu_custom_call.1} parent=0
    #allocation2 [shape = 'u8[8192]{0}', space=vmem, size = 0x2000, scoped, tag = 'input window, operand 0, single buffered']
    #allocation3 [shape = 's32[1]{0}', space=sflag, size = 0x4, scoped, tag = 'scoped memory for tpu_custom_call.1']
    #allocation4 [shape = 's32[1]{0}', space=sflag, size = 0x4, scoped, tag = 'scoped memory for tpu_custom_call.1']
    #allocation5 [shape = 'u8[65536]{0}', space=vmem, size = 0x10000, scoped, tag = 'input window, operand 1, single buffered']
    #allocation6 [shape = 's32[1]{0}', space=sflag, size = 0x4, scoped, tag = 'scoped memory for tpu_custom_call.1']
    #allocation7 [shape = 'u8[65536]{0}', space=vmem, size = 0x10000, scoped, tag = 'input window, operand 3, single buffered']
    #allocation8 [shape = 'u8[8192]{0}', space=vmem, size = 0x2000, scoped, tag = 'output window, operand 0, single buffered']
    %10 = vsyncpa [#allocation3], 0
    %11 = vsyncpa [#allocation6], 0
    %12 = vsyncpa [#allocation4], 0
    // Predicated region
    $region2: #{tpu_custom_call.1} parent=1 // pred_check
      _
    $region3: #{tpu_custom_call.1} parent=1 // pred_check_branch
      %14 = sbr.rel (0) target = $region5
    $region4: #{tpu_custom_call.1} parent=1 // pred_region
      %s16 = ssub.s32 256, 256
      %17 = vsyncadd [#allocation3], %s16
      %s18 = sshll.u32 [#allocation2], 4
      %s19 = int_to_ptr.vmem [resolvable:$true] %s18
      %24 = dma.hbm_to_vmem [thread:$0]  %s0, 256, %s19, [#allocation3], 128, 128, 8
    $region5: #{tpu_custom_call.1} parent=1 // pred_fallthru
      _
    // Predicated region
    $region6: #{tpu_custom_call.1} parent=1 // pred_check
      _
    $region7: #{tpu_custom_call.1} parent=1 // pred_check_branch
      %26 = sbr.rel (0) target = $region9
    $region8: #{tpu_custom_call.1} parent=1 // pred_region
      %s28 = ssub.s32 2048, 2048
      %29 = vsyncadd [#allocation6], %s28
      %s30 = sshll.u32 [#allocation5], 4
      %s31 = int_to_ptr.vmem [resolvable:$true] %s30
      %36 = dma.hbm_to_vmem [thread:$0]  %s1, 2048, %s31, [#allocation6], 128, 128, 8
    $region9: #{tpu_custom_call.1} parent=1 // pred_fallthru
      _
    // Predicated region
    $region10: #{tpu_custom_call.1} parent=1 // pred_check
      _
    $region11: #{tpu_custom_call.1} parent=1 // pred_check_branch
      %38 = sbr.rel (0) target = $region13
    $region12: #{tpu_custom_call.1} parent=1 // pred_region
      _
    $region13: #{tpu_custom_call.1} parent=1 // pred_fallthru
      _
    // Predicated region
    $region14: #{tpu_custom_call.1} parent=1 // pred_check
      _
    $region15: #{tpu_custom_call.1} parent=1 // pred_check_branch
      %40 = sbr.rel (0) target = $region17
    $region16: #{tpu_custom_call.1} parent=1 // pred_region
      %s42 = ssub.s32 2048, 2048
      %43 = vsyncadd [#allocation6], %s42
      %s44 = sshll.u32 [#allocation7], 4
      %s45 = int_to_ptr.vmem [resolvable:$true] %s44
      %50 = dma.hbm_to_vmem [thread:$0]  %s3, 2048, %s45, [#allocation6], 128, 128, 8
    $region17: #{tpu_custom_call.1} parent=1 // pred_fallthru
      _
    // Predicated region
    $region18: #{tpu_custom_call.1} parent=1 // pred_check
      _
    $region19: #{tpu_custom_call.1} parent=1 // pred_check_branch
      %52 = sbr.rel (0) target = $region21
    $region20: #{tpu_custom_call.1} parent=1 // pred_region
      _
    $region21: #{tpu_custom_call.1} parent=1 // pred_fallthru
      _
    // Predicated region
    $region22: #{tpu_custom_call.1} parent=1 // pred_check
      _
    $region23: #{tpu_custom_call.1} parent=1 // pred_check_branch
      %54 = sbr.rel (0) target = $region25
    $region24: #{tpu_custom_call.1} parent=1 // pred_region
      %55 = dma.done [#allocation3], 256
    $region25: #{tpu_custom_call.1} parent=1 // pred_fallthru
      _
    // Predicated region
    $region26: #{tpu_custom_call.1} parent=1 // pred_check
      _
    $region27: #{tpu_custom_call.1} parent=1 // pred_check_branch
      %57 = sbr.rel (0) target = $region29
    $region28: #{tpu_custom_call.1} parent=1 // pred_region
      %58 = dma.done [#allocation6], 2048
    $region29: #{tpu_custom_call.1} parent=1 // pred_fallthru
      _
    // Predicated region
    $region30: #{tpu_custom_call.1} parent=1 // pred_check
      _
    $region31: #{tpu_custom_call.1} parent=1 // pred_check_branch
      %60 = sbr.rel (0) target = $region33
    $region32: #{tpu_custom_call.1} parent=1 // pred_region
      %61 = dma.done [#allocation6], 2048
    $region33: #{tpu_custom_call.1} parent=1 // pred_fallthru
      _
    %p62 = scmp.eq.s32.totalorder 0, 0
    // Predicated region
    $region34: #{tpu_custom_call.1} parent=1 // pred_check
      %p63 = pneg %p62
    $region35: #{tpu_custom_call.1} parent=1 // pred_check_branch
      %65 = sbr.rel (%p63) target = $region37
    $region36: #{tpu_custom_call.1} parent=1 // pred_region
      %66 = vst [vmem:[#allocation8] sm:$0xff] 0.0
      %67 = vst [vmem:[#allocation8 + $0x8] sm:$0xff] 0.0
    $region37: #{tpu_custom_call.1} parent=1 // pred_fallthru
      _
    %v68 = vld [vmem:[#allocation2] sm:$0xff]
    %v69 = vld [vmem:[#allocation2 + $0x8] sm:$0xff]
    %v70 = vld [vmem:[#allocation5] sm:$0xff]
    %v71 = vld [vmem:[#allocation5 + $0x8] sm:$0xff]
    %v72 = vld [vmem:[#allocation5 + $0x10] sm:$0xff]
    %v73 = vld [vmem:[#allocation5 + $0x18] sm:$0xff]
    %v74 = vld [vmem:[#allocation5 + $0x20] sm:$0xff]
    %v75 = vld [vmem:[#allocation5 + $0x28] sm:$0xff]
    %v76 = vld [vmem:[#allocation5 + $0x30] sm:$0xff]
    %v77 = vld [vmem:[#allocation5 + $0x38] sm:$0xff]
    %v78 = vld [vmem:[#allocation5 + $0x40] sm:$0xff]
    %v79 = vld [vmem:[#allocation5 + $0x48] sm:$0xff]
    %v80 = vld [vmem:[#allocation5 + $0x50] sm:$0xff]
    %v81 = vld [vmem:[#allocation5 + $0x58] sm:$0xff]
    %v82 = vld [vmem:[#allocation5 + $0x60] sm:$0xff]
    %v83 = vld [vmem:[#allocation5 + $0x68] sm:$0xff]
    %v84 = vld [vmem:[#allocation5 + $0x70] sm:$0xff]
    %v85 = vld [vmem:[#allocation5 + $0x78] sm:$0xff]
    %v86 = vld [vmem:[%s2] sm:$0x1]
    %v88 = vlaneseq
    %v89 = vshrl.u32 %v88, 7
    %v90 = vsub.s32 0, %v89
    %v91 = vrot.slane %v86, %v90
    %93 = vmatprep.subr.mxu0 0.0
    %94 = vmatpush1.msra.mxu0 %v85
    %95 = vmatprep.subr.mxu0 0.0
    %96 = vmatpush1.msra.mxu0 %v84
    %97 = vmatprep.subr.mxu0 0.0
    %98 = vmatpush1.msra.mxu0 %v83
    %99 = vmatprep.subr.mxu0 0.0
    %100 = vmatpush1.msra.mxu0 %v82
    %101 = vmatprep.subr.mxu0 0.0
    %102 = vmatpush1.msra.mxu0 %v81
    %103 = vmatprep.subr.mxu0 0.0
    %104 = vmatpush1.msra.mxu0 %v80
    %105 = vmatprep.subr.mxu0 0.0
    %106 = vmatpush1.msra.mxu0 %v79
    %107 = vmatprep.subr.mxu0 0.0
    %108 = vmatpush1.msra.mxu0 %v78
    %109 = vmatprep.subr.mxu0 0.0
    %110 = vmatpush1.msra.mxu0 %v77
    %111 = vmatprep.subr.mxu0 0.0
    %112 = vmatpush1.msra.mxu0 %v76
    %113 = vmatprep.subr.mxu0 0.0
    %114 = vmatpush1.msra.mxu0 %v75
    %115 = vmatprep.subr.mxu0 0.0
    %116 = vmatpush1.msra.mxu0 %v74
    %117 = vmatprep.subr.mxu0 0.0
    %118 = vmatpush1.msra.mxu0 %v73
    %119 = vmatprep.subr.mxu0 0.0
    %120 = vmatpush1.msra.mxu0 %v72
    %121 = vmatprep.subr.mxu0 0.0
    %122 = vmatpush1.msra.mxu0 %v71
    %123 = vmatprep.subr.mxu0 0.0
    %124 = vmatpush1.msra.mxu0 %v70
    %125 = vmatprep.subr.mxu0 0.0
    %126 = vmatpush2.msra.mxu0 0.0
    %127 = vmatprep.subr.mxu0 0.0
    %128 = vmatpush2.msra.mxu0 0.0
    %129 = vmatprep.subr.mxu0 0.0
    %130 = vmatpush2.msra.mxu0 0.0
    %131 = vmatprep.subr.mxu0 0.0
    %132 = vmatpush2.msra.mxu0 0.0
    %133 = vmatprep.subr.mxu0 0.0
    %134 = vmatpush2.msra.mxu0 0.0
    %135 = vmatprep.subr.mxu0 0.0
    %136 = vmatpush2.msra.mxu0 0.0
    %137 = vmatprep.subr.mxu0 0.0
    %138 = vmatpush2.msra.mxu0 0.0
    %139 = vmatprep.subr.mxu0 0.0
    %140 = vmatpush2.msra.mxu0 0.0
    %141 = vmatprep.subr.mxu0 0.0
    %142 = vmatpush2.msra.mxu0 0.0
    %143 = vmatprep.subr.mxu0 0.0
    %144 = vmatpush2.msra.mxu0 0.0
    %145 = vmatprep.subr.mxu0 0.0
    %146 = vmatpush2.msra.mxu0 0.0
    %147 = vmatprep.subr.mxu0 0.0
    %148 = vmatpush2.msra.mxu0 0.0
    %149 = vmatprep.subr.mxu0 0.0
    %150 = vmatpush2.msra.mxu0 0.0
    %151 = vmatprep.subr.mxu0 0.0
    %152 = vmatpush2.msra.mxu0 0.0
    %153 = vmatprep.subr.mxu0 0.0
    %154 = vmatpush2.msra.mxu0 0.0
    %155 = vmatprep.subr.mxu0 0.0
    %156 = vmatpush2.msra.mxu0 0.0
    %157 = vmatprep.mubr.f32.mxu0 0.0
    %158 = vmatmul.mubr.f32.gmra.mxu0 %v68
    %v159 = vpop.f32.mrf.mxu0
    %v160 = vadd.f32 %v91, %v159
    %v161 = vpop.f32.mrf.mxu0
    %162 = vmatprep.mubr.f32.mxu0 0.0
    %163 = vmatmul.mubr.f32.gmra.mxu0 %v69
    %v164 = vpop.f32.mrf.mxu0
    %v165 = vadd.f32 %v91, %v164
    %v166 = vpop.f32.mrf.mxu0
    %167 = vdwg.mxu0
    %v168 = vmul.f32 %v160, 0.5
    %v169 = vmul.f32 %v165, 0.5
    %v170 = vmul.f32 %v160, 0.70710677
    %v171 = vmul.f32 %v165, 0.70710677
    %v172 = verf.f32.pop %v170
    %v173 = verf.f32.pop %v171
    %v174 = vadd.f32 %v172, 1.0
    %v175 = vadd.f32 %v173, 1.0
    %v176 = vmul.f32 %v168, %v174
    %v177 = vmul.f32 %v169, %v175
    %v178 = vld [vmem:[#allocation8] sm:$0xff]
    %v179 = vld [vmem:[#allocation8 + $0x8] sm:$0xff]
    %v180 = vld [vmem:[#allocation7] sm:$0xff]
    %v181 = vld [vmem:[#allocation7 + $0x8] sm:$0xff]
    %v182 = vld [vmem:[#allocation7 + $0x10] sm:$0xff]
    %v183 = vld [vmem:[#allocation7 + $0x18] sm:$0xff]
    %v184 = vld [vmem:[#allocation7 + $0x20] sm:$0xff]
    %v185 = vld [vmem:[#allocation7 + $0x28] sm:$0xff]
    %v186 = vld [vmem:[#allocation7 + $0x30] sm:$0xff]
    %v187 = vld [vmem:[#allocation7 + $0x38] sm:$0xff]
    %v188 = vld [vmem:[#allocation7 + $0x40] sm:$0xff]
    %v189 = vld [vmem:[#allocation7 + $0x48] sm:$0xff]
    %v190 = vld [vmem:[#allocation7 + $0x50] sm:$0xff]
    %v191 = vld [vmem:[#allocation7 + $0x58] sm:$0xff]
    %v192 = vld [vmem:[#allocation7 + $0x60] sm:$0xff]
    %v193 = vld [vmem:[#allocation7 + $0x68] sm:$0xff]
    %v194 = vld [vmem:[#allocation7 + $0x70] sm:$0xff]
    %v195 = vld [vmem:[#allocation7 + $0x78] sm:$0xff]
    %196 = vmatprep.subr.mxu0 0.0
    %197 = vmatpush1.msra.mxu0 %v195
    %198 = vmatprep.subr.mxu0 0.0
    %199 = vmatpush1.msra.mxu0 %v194
    %200 = vmatprep.subr.mxu0 0.0
    %201 = vmatpush1.msra.mxu0 %v193
    %202 = vmatprep.subr.mxu0 0.0
    %203 = vmatpush1.msra.mxu0 %v192
    %204 = vmatprep.subr.mxu0 0.0
    %205 = vmatpush1.msra.mxu0 %v191
    %206 = vmatprep.subr.mxu0 0.0
    %207 = vmatpush1.msra.mxu0 %v190
    %208 = vmatprep.subr.mxu0 0.0
    %209 = vmatpush1.msra.mxu0 %v189
    %210 = vmatprep.subr.mxu0 0.0
    %211 = vmatpush1.msra.mxu0 %v188
    %212 = vmatprep.subr.mxu0 0.0
    %213 = vmatpush1.msra.mxu0 %v187
    %214 = vmatprep.subr.mxu0 0.0
    %215 = vmatpush1.msra.mxu0 %v186
    %216 = vmatprep.subr.mxu0 0.0
    %217 = vmatpush1.msra.mxu0 %v185
    %218 = vmatprep.subr.mxu0 0.0
    %219 = vmatpush1.msra.mxu0 %v184
    %220 = vmatprep.subr.mxu0 0.0
    %221 = vmatpush1.msra.mxu0 %v183
    %222 = vmatprep.subr.mxu0 0.0
    %223 = vmatpush1.msra.mxu0 %v182
    %224 = vmatprep.subr.mxu0 0.0
    %225 = vmatpush1.msra.mxu0 %v181
    %226 = vmatprep.subr.mxu0 0.0
    %227 = vmatpush1.msra.mxu0 %v180
    %228 = vmatprep.subr.mxu0 0.0
    %229 = vmatpush2.msra.mxu0 0.0
    %230 = vmatprep.subr.mxu0 0.0
    %231 = vmatpush2.msra.mxu0 0.0
    %232 = vmatprep.subr.mxu0 0.0
    %233 = vmatpush2.msra.mxu0 0.0
    %234 = vmatprep.subr.mxu0 0.0
    %235 = vmatpush2.msra.mxu0 0.0
    %236 = vmatprep.subr.mxu0 0.0
    %237 = vmatpush2.msra.mxu0 0.0
    %238 = vmatprep.subr.mxu0 0.0
    %239 = vmatpush2.msra.mxu0 0.0
    %240 = vmatprep.subr.mxu0 0.0
    %241 = vmatpush2.msra.mxu0 0.0
    %242 = vmatprep.subr.mxu0 0.0
    %243 = vmatpush2.msra.mxu0 0.0
    %244 = vmatprep.subr.mxu0 0.0
    %245 = vmatpush2.msra.mxu0 0.0
    %246 = vmatprep.subr.mxu0 0.0
    %247 = vmatpush2.msra.mxu0 0.0
    %248 = vmatprep.subr.mxu0 0.0
    %249 = vmatpush2.msra.mxu0 0.0
    %250 = vmatprep.subr.mxu0 0.0
    %251 = vmatpush2.msra.mxu0 0.0
    %252 = vmatprep.subr.mxu0 0.0
    %253 = vmatpush2.msra.mxu0 0.0
    %254 = vmatprep.subr.mxu0 0.0
    %255 = vmatpush2.msra.mxu0 0.0
    %256 = vmatprep.subr.mxu0 0.0
    %257 = vmatpush2.msra.mxu0 0.0
    %258 = vmatprep.subr.mxu0 0.0
    %259 = vmatpush2.msra.mxu0 0.0
    %260 = vmatprep.mubr.f32.mxu0 0.0
    %261 = vmatmul.mubr.f32.gmra.mxu0 %v176
    %v262 = vpop.f32.mrf.mxu0
    %v263 = vadd.f32 0.0, %v262
    %v264 = vpop.f32.mrf.mxu0
    %265 = vmatprep.mubr.f32.mxu0 0.0
    %266 = vmatmul.mubr.f32.gmra.mxu0 %v177
    %v267 = vpop.f32.mrf.mxu0
    %v268 = vadd.f32 0.0, %v267
    %v269 = vpop.f32.mrf.mxu0
    %270 = vdwg.mxu0
    %v271 = vadd.f32 %v178, %v263
    %v272 = vadd.f32 %v179, %v268
    %273 = vst [vmem:[#allocation8] sm:$0xff] %v271
    %274 = vst [vmem:[#allocation8 + $0x8] sm:$0xff] %v272
    // Predicated region
    $region38: #{tpu_custom_call.1} parent=1 // pred_check
      %p275 = pneg %p62
    $region39: #{tpu_custom_call.1} parent=1 // pred_check_branch
      %277 = sbr.rel (%p275) target = $region41
    $region40: #{tpu_custom_call.1} parent=1 // pred_region
      %v278 = vld [vmem:[#allocation8] sm:$0xff]
      %v279 = vld [vmem:[#allocation8 + $0x8] sm:$0xff]
      %v280 = vld [vmem:[%s4] sm:$0x1]
      %v282 = vlaneseq
      %v283 = vshrl.u32 %v282, 7
      %v284 = vsub.s32 0, %v283
      %v285 = vrot.slane %v280, %v284
      %v287 = vadd.f32 %v278, %v285
      %v288 = vadd.f32 %v279, %v285
      %289 = vst [vmem:[#allocation8] sm:$0xff] %v287
      %290 = vst [vmem:[#allocation8 + $0x8] sm:$0xff] %v288
    $region41: #{tpu_custom_call.1} parent=1 // pred_fallthru
      _
    // Predicated region
    $region42: #{tpu_custom_call.1} parent=1 // pred_check
      _
    $region43: #{tpu_custom_call.1} parent=1 // pred_check_branch
      %292 = sbr.rel (0) target = $region45
    $region44: #{tpu_custom_call.1} parent=1 // pred_region
      %s294 = ssub.s32 256, 256
      %295 = vsyncadd [#allocation4], %s294
      %s296 = sshll.u32 [#allocation8], 4
      %s297 = int_to_ptr.vmem [resolvable:$true] %s296
      %302 = dma.vmem_to_hbm [thread:$0]  %s297, 256, %s5, [#allocation4], 128, 128, 8
    $region45: #{tpu_custom_call.1} parent=1 // pred_fallthru
      _
    // Predicated region
    $region46: #{tpu_custom_call.1} parent=1 // pred_check
      _
    $region47: #{tpu_custom_call.1} parent=1 // pred_check_branch
      %304 = sbr.rel (0) target = $region49
    $region48: #{tpu_custom_call.1} parent=1 // pred_region
      %305 = dma.done [#allocation4], 256
    $region49: #{tpu_custom_call.1} parent=1 // pred_fallthru
      _
    %306 = vsyncpa [#allocation3], 1
    %307 = vsyncpa [#allocation6], 1
    %308 = vsyncpa [#allocation4], 1

</llo_original>
